<compile_context>
chip_gen: v5e
topology: v5e:2x2
jax: 0.10.0
libtpu: 0.0.40
codegen_flags: <defaults>
</compile_context>

<pallas_src>
import functools

import jax
import jax.numpy as jnp
from jax.experimental import pallas as pl
from jax.experimental.pallas import tpu as pltpu

LANE = 128
SUBLANE = 8


def _round_up(n, m):
    return ((n + m - 1) // m) * m


def _fused_mlp_kernel(*refs, num_layers):
    # refs = (x_ref, w0, b0, w1, b1, ..., w_{L-1}, b_{L-1}, o_ref)
    x_ref = refs[0]
    o_ref = refs[-1]
    wb_refs = refs[1:-1]

    h = x_ref[...]
    for li in range(num_layers):
        w = wb_refs[2 * li][...]
        b = wb_refs[2 * li + 1][...]           # (1, n_pad), broadcasts over batch rows
        h = jnp.dot(h, w, preferred_element_type=jnp.float32) + b
        if li != num_layers - 1:
            h = jnp.maximum(h, 0.0)            # ReLU on all hidden layers

    # out[:, 1:] = relu(out[:, 1:]); padded tail columns are already exactly zero.
    col = jax.lax.broadcasted_iota(jnp.int32, h.shape, 1)
    h = jnp.where(col >= 1, jnp.maximum(h, 0.0), h)

    # cumsum along the feature (lane) axis via an upper-triangular ones matmul:
    #   cumsum(h)[b, j] = sum_{i <= j} h[b, i] = (h @ T)[b, j],   T[i, j] = 1 iff i <= j
    n = h.shape[1]
    r = jax.lax.broadcasted_iota(jnp.int32, (n, n), 0)
    c = jax.lax.broadcasted_iota(jnp.int32, (n, n), 1)
    tri = jnp.where(r <= c, 1.0, 0.0).astype(jnp.float32)
    h = jnp.dot(h, tri, preferred_element_type=jnp.float32)

    o_ref[...] = h.astype(o_ref.dtype)


def feedforward_incremental_forward(x, params, output_size, *, max_batch_tile=256):
    """x: (B, input_size); params: list of (w: (in, out), b: (out,)) float32."""
    B, in_size = x.shape
    in_pad = _round_up(in_size, LANE)

    # Batch tile: sublane-aligned, capped so weights + activations stay well under VMEM.
    bt = min(_round_up(B, SUBLANE), max_batch_tile)
    B_pad = _round_up(_round_up(B, SUBLANE), bt)

    x_pad = jnp.zeros((B_pad, in_pad), jnp.float32).at[:B, :in_size].set(x)

    # Zero-pad every layer to lane-friendly shapes.
    padded = []
    k_pad = in_pad
    for (w, b) in params:
        fan_in, fan_out = w.shape
        n_pad = _round_up(fan_out, LANE)
        w_p = jnp.zeros((k_pad, n_pad), jnp.float32).at[:fan_in, :fan_out].set(w)
        b_p = jnp.zeros((1, n_pad), jnp.float32).at[:, :fan_out].set(b.reshape(1, -1))
        padded.append((w_p, b_p))
        k_pad = n_pad

    out_pad = padded[-1][0].shape[1]
    num_layers = len(params)

    flat_inputs = [x_pad]
    in_specs = [pl.BlockSpec((bt, in_pad), lambda i: (i, 0))]
    for (w_p, b_p) in padded:
        flat_inputs += [w_p, b_p]
        # Constant block index across the grid -> fetched once, VMEM-resident.
        in_specs += [
            pl.BlockSpec(w_p.shape, lambda i: (0, 0)),
            pl.BlockSpec(b_p.shape, lambda i: (0, 0)),
        ]

    kernel = functools.partial(_fused_mlp_kernel, num_layers=num_layers)
    out = pl.pallas_call(
        kernel,
        out_shape=jax.ShapeDtypeStruct((B_pad, out_pad), jnp.float32),
        grid=(B_pad // bt,),
        in_specs=in_specs,
        out_specs=pl.BlockSpec((bt, out_pad), lambda i: (i, 0)),
        compiler_params=pltpu.CompilerParams(
            dimension_semantics=("parallel",),
        ),
    )(*flat_inputs)

    # Slice the real output back out of the lane-padded block.
    return out[:B, :output_size]


def init_params(key, input_size, hidden_size, output_size, num_hidden_layers):
    """Mimics nn.Linear default init (uniform +-1/sqrt(fan_in)); weights stored (in, out)."""
    dims = [input_size] + [hidden_size] * num_hidden_layers + [output_size]
    params = []
    for li in range(len(dims) - 1):
        fan_in, fan_out = dims[li], dims[li + 1]
        key, kw, kb = jax.random.split(key, 3)
        bound = 1.0 / (fan_in ** 0.5)
        w = jax.random.uniform(kw, (fan_in, fan_out), jnp.float32, -bound, bound)
        b = jax.random.uniform(kb, (fan_out,), jnp.float32, -bound, bound)
        params.append((w, b))
    return params


def reference_forward(x, params):
    """Pure-JAX reference mirroring the PyTorch module forward (eval mode)."""
    h = x
    L = len(params)
    for i, (w, b) in enumerate(params):
        h = h @ w + b.reshape(1, -1)
        if i != L - 1:
            h = jnp.maximum(h, 0.0)
    out = h.at[:, 1:].set(jnp.maximum(h[:, 1:], 0.0))
    return jnp.cumsum(out, axis=1)


if __name__ == "__main__":
    batch = 8
    input_size = 32
    hidden_size = 32
    output_size = 3
    num_hidden_layers = 2

    key = jax.random.PRNGKey(0)
    key, kx = jax.random.split(key)
    x = jax.random.normal(kx, (batch, input_size), jnp.float32)

    params = init_params(key, input_size, hidden_size, output_size, num_hidden_layers)

    y = feedforward_incremental_forward(x, params, output_size)
    y = jax.block_until_ready(y)

    assert y.shape == (batch, output_size), y.shape

    y_ref = jax.block_until_ready(reference_forward(x, params))
    max_err = float(jnp.max(jnp.abs(y - y_ref)))
    assert jnp.allclose(y, y_ref, rtol=2e-2, atol=2e-2), max_err

    print("KERNEL_OK")
</pallas_src>

<mosaic_0001>
module attributes {stable_mosaic.version = 11 : i64} {
  func.func @_fused_mlp_kernel(%arg0: i32, %arg1: memref<8x128xf32, #tpu.memory_space<vmem>>, %arg2: memref<128x128xf32, #tpu.memory_space<vmem>>, %arg3: memref<1x128xf32, #tpu.memory_space<vmem>>, %arg4: memref<128x128xf32, #tpu.memory_space<vmem>>, %arg5: memref<1x128xf32, #tpu.memory_space<vmem>>, %arg6: memref<128x128xf32, #tpu.memory_space<vmem>>, %arg7: memref<1x128xf32, #tpu.memory_space<vmem>>, %arg8: memref<8x128xf32, #tpu.memory_space<vmem>>) attributes {dimension_semantics = [#tpu.dimension_semantics<parallel>], iteration_bounds = array<i64: 1>, scalar_prefetch = 0 : i64, scratch_operands = 0 : i64, tpu.core_type = #tpu.core_type<tc>, window_params = [{transform_indices = @transform_0, window_bounds = array<i64: 8, 128>}, {pipeline_mode = #tpu.pipeline_mode<synchronous>, transform_indices = @transform_1, window_bounds = array<i64: 128, 128>}, {pipeline_mode = #tpu.pipeline_mode<synchronous>, transform_indices = @transform_2, window_bounds = array<i64: 1, 128>}, {pipeline_mode = #tpu.pipeline_mode<synchronous>, transform_indices = @transform_3, window_bounds = array<i64: 128, 128>}, {pipeline_mode = #tpu.pipeline_mode<synchronous>, transform_indices = @transform_4, window_bounds = array<i64: 1, 128>}, {pipeline_mode = #tpu.pipeline_mode<synchronous>, transform_indices = @transform_5, window_bounds = array<i64: 128, 128>}, {pipeline_mode = #tpu.pipeline_mode<synchronous>, transform_indices = @transform_6, window_bounds = array<i64: 1, 128>}, {transform_indices = @transform_7, window_bounds = array<i64: 8, 128>}]} {
    %c0 = arith.constant 0 : index
    %c0_0 = arith.constant 0 : index
    %0 = vector.load %arg1[%c0, %c0_0] : memref<8x128xf32, #tpu.memory_space<vmem>>, vector<8x128xf32>
    %c0_1 = arith.constant 0 : index
    %c0_2 = arith.constant 0 : index
    %1 = vector.load %arg2[%c0_1, %c0_2] : memref<128x128xf32, #tpu.memory_space<vmem>>, vector<128x128xf32>
    %c0_3 = arith.constant 0 : index
    %c0_4 = arith.constant 0 : index
    %2 = vector.load %arg3[%c0_3, %c0_4] : memref<1x128xf32, #tpu.memory_space<vmem>>, vector<1x128xf32>
    %cst = arith.constant dense<0.000000e+00> : vector<8x128xf32>
    %3 = tpu.matmul %0, %1, %cst {dimension_numbers = #tpu.dot_dimension_numbers<[1], [0], [0], [1], [0, 0, 1, 1], [], []>} : vector<8x128xf32>, vector<128x128xf32>, vector<8x128xf32> -> vector<8x128xf32>
    %4 = vector.broadcast %2 : vector<1x128xf32> to vector<8x128xf32>
    %5 = arith.addf %3, %4 : vector<8x128xf32>
    %cst_5 = arith.constant 0.000000e+00 : f32
    %6 = vector.broadcast %cst_5 : f32 to vector<8x128xf32>
    %7 = arith.maximumf %5, %6 : vector<8x128xf32>
    %c0_6 = arith.constant 0 : index
    %c0_7 = arith.constant 0 : index
    %8 = vector.load %arg4[%c0_6, %c0_7] : memref<128x128xf32, #tpu.memory_space<vmem>>, vector<128x128xf32>
    %c0_8 = arith.constant 0 : index
    %c0_9 = arith.constant 0 : index
    %9 = vector.load %arg5[%c0_8, %c0_9] : memref<1x128xf32, #tpu.memory_space<vmem>>, vector<1x128xf32>
    %cst_10 = arith.constant dense<0.000000e+00> : vector<8x128xf32>
    %10 = tpu.matmul %7, %8, %cst_10 {dimension_numbers = #tpu.dot_dimension_numbers<[1], [0], [0], [1], [0, 0, 1, 1], [], []>} : vector<8x128xf32>, vector<128x128xf32>, vector<8x128xf32> -> vector<8x128xf32>
    %11 = vector.broadcast %9 : vector<1x128xf32> to vector<8x128xf32>
    %12 = arith.addf %10, %11 : vector<8x128xf32>
    %cst_11 = arith.constant 0.000000e+00 : f32
    %13 = vector.broadcast %cst_11 : f32 to vector<8x128xf32>
    %14 = arith.maximumf %12, %13 : vector<8x128xf32>
    %c0_12 = arith.constant 0 : index
    %c0_13 = arith.constant 0 : index
    %15 = vector.load %arg6[%c0_12, %c0_13] : memref<128x128xf32, #tpu.memory_space<vmem>>, vector<128x128xf32>
    %c0_14 = arith.constant 0 : index
    %c0_15 = arith.constant 0 : index
    %16 = vector.load %arg7[%c0_14, %c0_15] : memref<1x128xf32, #tpu.memory_space<vmem>>, vector<1x128xf32>
    %cst_16 = arith.constant dense<0.000000e+00> : vector<8x128xf32>
    %17 = tpu.matmul %14, %15, %cst_16 {dimension_numbers = #tpu.dot_dimension_numbers<[1], [0], [0], [1], [0, 0, 1, 1], [], []>} : vector<8x128xf32>, vector<128x128xf32>, vector<8x128xf32> -> vector<8x128xf32>
    %18 = vector.broadcast %16 : vector<1x128xf32> to vector<8x128xf32>
    %19 = arith.addf %17, %18 : vector<8x128xf32>
    %20 = tpu.iota {dimensions = array<i32: 1>} : vector<8x128xi32>
    %c1_i32 = arith.constant 1 : i32
    %21 = vector.broadcast %c1_i32 : i32 to vector<8x128xi32>
    %22 = arith.cmpi sge, %20, %21 : vector<8x128xi32>
    %cst_17 = arith.constant 0.000000e+00 : f32
    %23 = vector.broadcast %cst_17 : f32 to vector<8x128xf32>
    %24 = arith.maximumf %19, %23 : vector<8x128xf32>
    %25 = arith.select %22, %24, %19 : vector<8x128xi1>, vector<8x128xf32>
    %26 = tpu.iota {dimensions = array<i32: 0>} : vector<128x128xi32>
    %27 = tpu.iota {dimensions = array<i32: 1>} : vector<128x128xi32>
    %28 = arith.cmpi sle, %26, %27 : vector<128x128xi32>
    %cst_18 = arith.constant 1.000000e+00 : f32
    %cst_19 = arith.constant 0.000000e+00 : f32
    %29 = vector.broadcast %cst_18 : f32 to vector<128x128xf32>
    %30 = vector.broadcast %cst_19 : f32 to vector<128x128xf32>
    %31 = arith.select %28, %29, %30 : vector<128x128xi1>, vector<128x128xf32>
    %cst_20 = arith.constant dense<0.000000e+00> : vector<8x128xf32>
    %32 = tpu.matmul %25, %31, %cst_20 {dimension_numbers = #tpu.dot_dimension_numbers<[1], [0], [0], [1], [0, 0, 1, 1], [], []>} : vector<8x128xf32>, vector<128x128xf32>, vector<8x128xf32> -> vector<8x128xf32>
    %c0_21 = arith.constant 0 : index
    %c0_22 = arith.constant 0 : index
    %33 = vector.load %arg8[%c0_21, %c0_22] : memref<8x128xf32, #tpu.memory_space<vmem>>, vector<8x128xf32>
    tpu.vector_store %arg8[%c0_21, %c0_22], %32 {strides = array<i32>} : memref<8x128xf32, #tpu.memory_space<vmem>>, vector<8x128xf32>,
    return
  }
  func.func @transform_0(%arg0: i32) -> (i32, i32) {
    %c0_i32 = arith.constant 0 : i32
    %c0_i32_0 = arith.constant 0 : i32
    return %arg0, %c0_i32 : i32, i32
  }
  func.func @transform_1(%arg0: i32) -> (i32, i32) {
    %c0_i32 = arith.constant 0 : i32
    %c0_i32_0 = arith.constant 0 : i32
    %c0_i32_1 = arith.constant 0 : i32
    return %c0_i32, %c0_i32_0 : i32, i32
  }
  func.func @transform_2(%arg0: i32) -> (i32, i32) {
    %c0_i32 = arith.constant 0 : i32
    %c0_i32_0 = arith.constant 0 : i32
    %c0_i32_1 = arith.constant 0 : i32
    return %c0_i32, %c0_i32_0 : i32, i32
  }
  func.func @transform_3(%arg0: i32) -> (i32, i32) {
    %c0_i32 = arith.constant 0 : i32
    %c0_i32_0 = arith.constant 0 : i32
    %c0_i32_1 = arith.constant 0 : i32
    return %c0_i32, %c0_i32_0 : i32, i32
  }
  func.func @transform_4(%arg0: i32) -> (i32, i32) {
    %c0_i32 = arith.constant 0 : i32
    %c0_i32_0 = arith.constant 0 : i32
    %c0_i32_1 = arith.constant 0 : i32
    return %c0_i32, %c0_i32_0 : i32, i32
  }
  func.func @transform_5(%arg0: i32) -> (i32, i32) {
    %c0_i32 = arith.constant 0 : i32
    %c0_i32_0 = arith.constant 0 : i32
    %c0_i32_1 = arith.constant 0 : i32
    return %c0_i32, %c0_i32_0 : i32, i32
  }
  func.func @transform_6(%arg0: i32) -> (i32, i32) {
    %c0_i32 = arith.constant 0 : i32
    %c0_i32_0 = arith.constant 0 : i32
    %c0_i32_1 = arith.constant 0 : i32
    return %c0_i32, %c0_i32_0 : i32, i32
  }
  func.func @transform_7(%arg0: i32) -> (i32, i32) {
    %c0_i32 = arith.constant 0 : i32
    %c0_i32_0 = arith.constant 0 : i32
    return %arg0, %c0_i32 : i32, i32
  }
}

</mosaic_0001>

<llo_original>
// kernel: tpu_custom_call.1
$region0: #{tpu_custom_call.1}
  #allocation0 [shape = 'u32[]', space=smem, size = 0x4, offset = 0x4, fixed_abs, tag = 'smem constant byte address 0x4 - core index']
  #allocation1 [shape = 'u32[72,128]{1,0:T(1,128)}', space=vmem, size = 0x9000, scoped, tag = 'internal scratch']
  %s0 = inlined_call_operand.hbm [shape: f32[8,128], index: 0, kind: input, shape index: {}]
  %s1 = inlined_call_operand.hbm [shape: f32[128,128], index: 1, kind: input, shape index: {}]
  %s2 = inlined_call_operand.vmem [shape: f32[1,128], index: 2, kind: input, shape index: {}]
  %s3 = inlined_call_operand.hbm [shape: f32[128,128], index: 3, kind: input, shape index: {}]
  %s4 = inlined_call_operand.vmem [shape: f32[1,128], index: 4, kind: input, shape index: {}]
  %s5 = inlined_call_operand.hbm [shape: f32[128,128], index: 5, kind: input, shape index: {}]
  %s6 = inlined_call_operand.vmem [shape: f32[1,128], index: 6, kind: input, shape index: {}]
  %s7 = inlined_call_operand.hbm [shape: f32[8,128], index: 7, kind: output, shape index: {}]
  %s8 = sld [smem:[#allocation0]]
  $region54: #{tpu_custom_call.1} parent=0
    _
  %s10 = ssub.s32 1, %s8
  %s11 = scalar_select 0, %s10, %s8
  $region1: #{tpu_custom_call.1} parent=0
    #allocation2 [shape = 'u8[4096]{0}', space=vmem, size = 0x1000, scoped, tag = 'input window, operand 0, single buffered']
    #allocation3 [shape = 's32[1]{0}', space=sflag, size = 0x4, scoped, tag = 'scoped memory for tpu_custom_call.1']
    #allocation4 [shape = 's32[1]{0}', space=sflag, size = 0x4, scoped, tag = 'scoped memory for tpu_custom_call.1']
    #allocation5 [shape = 'u8[65536]{0}', space=vmem, size = 0x10000, scoped, tag = 'input window, operand 1, single buffered']
    #allocation6 [shape = 's32[1]{0}', space=sflag, size = 0x4, scoped, tag = 'scoped memory for tpu_custom_call.1']
    #allocation7 [shape = 'u8[65536]{0}', space=vmem, size = 0x10000, scoped, tag = 'input window, operand 3, single buffered']
    #allocation8 [shape = 'u8[65536]{0}', space=vmem, size = 0x10000, scoped, tag = 'input window, operand 5, single buffered']
    #allocation9 [shape = 's32[1]{0}', space=sflag, size = 0x4, scoped, tag = 'scoped memory for tpu_custom_call.1']
    #allocation10 [shape = 'u8[4096]{0}', space=vmem, size = 0x1000, scoped, tag = 'output window, operand 0, single buffered']
    %12 = vsyncpa [#allocation3], 0
    %13 = vsyncpa [#allocation6], 0
    %14 = vsyncpa [#allocation9], 0
    %15 = vsyncpa [#allocation4], 0
    // Predicated region
    $region2: #{tpu_custom_call.1} parent=1 // pred_check
      _
    $region3: #{tpu_custom_call.1} parent=1 // pred_check_branch
      %17 = sbr.rel (0) target = $region5
    $region4: #{tpu_custom_call.1} parent=1 // pred_region
      %19 = vsyncadd [#allocation3], 0
      %s21 = sshll.u32 %s0, 4
      %s22 = int_to_ptr.hbm [resolvable:$true] %s21
      %s23 = sshll.u32 [#allocation2], 4
      %s24 = int_to_ptr.vmem [resolvable:$true] %s23
      %26 = dma.hbm_to_vmem [thread:$0]  %s22, 128, %s24, [#allocation3]
    $region5: #{tpu_custom_call.1} parent=1 // pred_fallthru
      _
    // Predicated region
    $region6: #{tpu_custom_call.1} parent=1 // pred_check
      _
    $region7: #{tpu_custom_call.1} parent=1 // pred_check_branch
      %28 = sbr.rel (0) target = $region9
    $region8: #{tpu_custom_call.1} parent=1 // pred_region
      %30 = vsyncadd [#allocation6], 0
      %s31 = sshll.u32 %s1, 4
      %s32 = int_to_ptr.hbm [resolvable:$true] %s31
      %s33 = sshll.u32 [#allocation5], 4
      %s34 = int_to_ptr.vmem [resolvable:$true] %s33
      %39 = dma.hbm_to_vmem [thread:$0]  %s32, 2048, %s34, [#allocation6], 128, 128, 8
    $region9: #{tpu_custom_call.1} parent=1 // pred_fallthru
      _
    // Predicated region
    $region10: #{tpu_custom_call.1} parent=1 // pred_check
      _
    $region11: #{tpu_custom_call.1} parent=1 // pred_check_branch
      %41 = sbr.rel (0) target = $region13
    $region12: #{tpu_custom_call.1} parent=1 // pred_region
      _
    $region13: #{tpu_custom_call.1} parent=1 // pred_fallthru
      _
    // Predicated region
    $region14: #{tpu_custom_call.1} parent=1 // pred_check
      _
    $region15: #{tpu_custom_call.1} parent=1 // pred_check_branch
      %43 = sbr.rel (0) target = $region17
    $region16: #{tpu_custom_call.1} parent=1 // pred_region
      %45 = vsyncadd [#allocation6], 0
      %s46 = sshll.u32 %s3, 4
      %s47 = int_to_ptr.hbm [resolvable:$true] %s46
      %s48 = sshll.u32 [#allocation7], 4
      %s49 = int_to_ptr.vmem [resolvable:$true] %s48
      %54 = dma.hbm_to_vmem [thread:$0]  %s47, 2048, %s49, [#allocation6], 128, 128, 8
    $region17: #{tpu_custom_call.1} parent=1 // pred_fallthru
      _
    // Predicated region
    $region18: #{tpu_custom_call.1} parent=1 // pred_check
      _
    $region19: #{tpu_custom_call.1} parent=1 // pred_check_branch
      %56 = sbr.rel (0) target = $region21
    $region20: #{tpu_custom_call.1} parent=1 // pred_region
      _
    $region21: #{tpu_custom_call.1} parent=1 // pred_fallthru
      _
    // Predicated region
    $region22: #{tpu_custom_call.1} parent=1 // pred_check
      _
    $region23: #{tpu_custom_call.1} parent=1 // pred_check_branch
      %58 = sbr.rel (0) target = $region25
    $region24: #{tpu_custom_call.1} parent=1 // pred_region
      %60 = vsyncadd [#allocation9], 0
      %s61 = sshll.u32 %s5, 4
      %s62 = int_to_ptr.hbm [resolvable:$true] %s61
      %s63 = sshll.u32 [#allocation8], 4
      %s64 = int_to_ptr.vmem [resolvable:$true] %s63
      %69 = dma.hbm_to_vmem [thread:$0]  %s62, 2048, %s64, [#allocation9], 128, 128, 8
    $region25: #{tpu_custom_call.1} parent=1 // pred_fallthru
      _
    // Predicated region
    $region26: #{tpu_custom_call.1} parent=1 // pred_check
      _
    $region27: #{tpu_custom_call.1} parent=1 // pred_check_branch
      %71 = sbr.rel (0) target = $region29
    $region28: #{tpu_custom_call.1} parent=1 // pred_region
      _
    $region29: #{tpu_custom_call.1} parent=1 // pred_fallthru
      _
    // Predicated region
    $region30: #{tpu_custom_call.1} parent=1 // pred_check
      _
    $region31: #{tpu_custom_call.1} parent=1 // pred_check_branch
      %73 = sbr.rel (0) target = $region33
    $region32: #{tpu_custom_call.1} parent=1 // pred_region
      %75 = dma.done [#allocation3], 128
    $region33: #{tpu_custom_call.1} parent=1 // pred_fallthru
      _
    // Predicated region
    $region34: #{tpu_custom_call.1} parent=1 // pred_check
      _
    $region35: #{tpu_custom_call.1} parent=1 // pred_check_branch
      %77 = sbr.rel (0) target = $region37
    $region36: #{tpu_custom_call.1} parent=1 // pred_region
      %79 = dma.done [#allocation6], 2048
    $region37: #{tpu_custom_call.1} parent=1 // pred_fallthru
      _
    // Predicated region
    $region38: #{tpu_custom_call.1} parent=1 // pred_check
      _
    $region39: #{tpu_custom_call.1} parent=1 // pred_check_branch
      %81 = sbr.rel (0) target = $region41
    $region40: #{tpu_custom_call.1} parent=1 // pred_region
      %83 = dma.done [#allocation6], 2048
    $region41: #{tpu_custom_call.1} parent=1 // pred_fallthru
      _
    // Predicated region
    $region42: #{tpu_custom_call.1} parent=1 // pred_check
      _
    $region43: #{tpu_custom_call.1} parent=1 // pred_check_branch
      %85 = sbr.rel (0) target = $region45
    $region44: #{tpu_custom_call.1} parent=1 // pred_region
      %87 = dma.done [#allocation9], 2048
    $region45: #{tpu_custom_call.1} parent=1 // pred_fallthru
      _
    %v88 = vld [vmem:[#allocation2] sm:$0xff]
    %v89 = vld [vmem:[#allocation5] sm:$0xff]
    %v90 = vld [vmem:[#allocation5 + $0x8] sm:$0xff]
    %v91 = vld [vmem:[#allocation5 + $0x10] sm:$0xff]
    %v92 = vld [vmem:[#allocation5 + $0x18] sm:$0xff]
    %v93 = vld [vmem:[#allocation5 + $0x20] sm:$0xff]
    %v94 = vld [vmem:[#allocation5 + $0x28] sm:$0xff]
    %v95 = vld [vmem:[#allocation5 + $0x30] sm:$0xff]
    %v96 = vld [vmem:[#allocation5 + $0x38] sm:$0xff]
    %v97 = vld [vmem:[#allocation5 + $0x40] sm:$0xff]
    %v98 = vld [vmem:[#allocation5 + $0x48] sm:$0xff]
    %v99 = vld [vmem:[#allocation5 + $0x50] sm:$0xff]
    %v100 = vld [vmem:[#allocation5 + $0x58] sm:$0xff]
    %v101 = vld [vmem:[#allocation5 + $0x60] sm:$0xff]
    %v102 = vld [vmem:[#allocation5 + $0x68] sm:$0xff]
    %v103 = vld [vmem:[#allocation5 + $0x70] sm:$0xff]
    %v104 = vld [vmem:[#allocation5 + $0x78] sm:$0xff]
    %v105 = vld [vmem:[%s2] sm:$0x1]
    %v107 = vperm.slane %v105, 0
    %109 = vmatpush.msra.mxu0 %v104
    %110 = vmatpush.msra.mxu0 %v103
    %111 = vmatpush.msra.mxu0 %v102
    %112 = vmatpush.msra.mxu0 %v101
    %113 = vmatpush.msra.mxu0 %v100
    %114 = vmatpush.msra.mxu0 %v99
    %115 = vmatpush.msra.mxu0 %v98
    %116 = vmatpush.msra.mxu0 %v97
    %117 = vmatpush.msra.mxu0 %v96
    %118 = vmatpush.msra.mxu0 %v95
    %119 = vmatpush.msra.mxu0 %v94
    %120 = vmatpush.msra.mxu0 %v93
    %121 = vmatpush.msra.mxu0 %v92
    %122 = vmatpush.msra.mxu0 %v91
    %123 = vmatpush.msra.mxu0 %v90
    %124 = vmatpush.msra.mxu0 %v89
    %125 = vmatmul.f32.gmra.mxu0 %v88
    %v126 = vpop.f32.mrf.mxu0
    %v127 = vadd.f32 %v107, %v126
    %128 = vdwg.mxu0
    %v129 = vmax.f32 %v127, 0.0
    %v130 = vld [vmem:[#allocation7] sm:$0xff]
    %v131 = vld [vmem:[#allocation7 + $0x8] sm:$0xff]
    %v132 = vld [vmem:[#allocation7 + $0x10] sm:$0xff]
    %v133 = vld [vmem:[#allocation7 + $0x18] sm:$0xff]
    %v134 = vld [vmem:[#allocation7 + $0x20] sm:$0xff]
    %v135 = vld [vmem:[#allocation7 + $0x28] sm:$0xff]
    %v136 = vld [vmem:[#allocation7 + $0x30] sm:$0xff]
    %v137 = vld [vmem:[#allocation7 + $0x38] sm:$0xff]
    %v138 = vld [vmem:[#allocation7 + $0x40] sm:$0xff]
    %v139 = vld [vmem:[#allocation7 + $0x48] sm:$0xff]
    %v140 = vld [vmem:[#allocation7 + $0x50] sm:$0xff]
    %v141 = vld [vmem:[#allocation7 + $0x58] sm:$0xff]
    %v142 = vld [vmem:[#allocation7 + $0x60] sm:$0xff]
    %v143 = vld [vmem:[#allocation7 + $0x68] sm:$0xff]
    %v144 = vld [vmem:[#allocation7 + $0x70] sm:$0xff]
    %v145 = vld [vmem:[#allocation7 + $0x78] sm:$0xff]
    %v146 = vld [vmem:[%s4] sm:$0x1]
    %v148 = vperm.slane %v146, 0
    %150 = vmatpush.msra.mxu0 %v145
    %151 = vmatpush.msra.mxu0 %v144
    %152 = vmatpush.msra.mxu0 %v143
    %153 = vmatpush.msra.mxu0 %v142
    %154 = vmatpush.msra.mxu0 %v141
    %155 = vmatpush.msra.mxu0 %v140
    %156 = vmatpush.msra.mxu0 %v139
    %157 = vmatpush.msra.mxu0 %v138
    %158 = vmatpush.msra.mxu0 %v137
    %159 = vmatpush.msra.mxu0 %v136
    %160 = vmatpush.msra.mxu0 %v135
    %161 = vmatpush.msra.mxu0 %v134
    %162 = vmatpush.msra.mxu0 %v133
    %163 = vmatpush.msra.mxu0 %v132
    %164 = vmatpush.msra.mxu0 %v131
    %165 = vmatpush.msra.mxu0 %v130
    %166 = vmatmul.f32.gmra.mxu0 %v129
    %v167 = vpop.f32.mrf.mxu0
    %v168 = vadd.f32 %v148, %v167
    %169 = vdwg.mxu0
    %v170 = vmax.f32 %v168, 0.0
    %v171 = vld [vmem:[#allocation8] sm:$0xff]
    %v172 = vld [vmem:[#allocation8 + $0x8] sm:$0xff]
    %v173 = vld [vmem:[#allocation8 + $0x10] sm:$0xff]
    %v174 = vld [vmem:[#allocation8 + $0x18] sm:$0xff]
    %v175 = vld [vmem:[#allocation8 + $0x20] sm:$0xff]
    %v176 = vld [vmem:[#allocation8 + $0x28] sm:$0xff]
    %v177 = vld [vmem:[#allocation8 + $0x30] sm:$0xff]
    %v178 = vld [vmem:[#allocation8 + $0x38] sm:$0xff]
    %v179 = vld [vmem:[#allocation8 + $0x40] sm:$0xff]
    %v180 = vld [vmem:[#allocation8 + $0x48] sm:$0xff]
    %v181 = vld [vmem:[#allocation8 + $0x50] sm:$0xff]
    %v182 = vld [vmem:[#allocation8 + $0x58] sm:$0xff]
    %v183 = vld [vmem:[#allocation8 + $0x60] sm:$0xff]
    %v184 = vld [vmem:[#allocation8 + $0x68] sm:$0xff]
    %v185 = vld [vmem:[#allocation8 + $0x70] sm:$0xff]
    %v186 = vld [vmem:[#allocation8 + $0x78] sm:$0xff]
    %v187 = vld [vmem:[%s6] sm:$0x1]
    %v189 = vperm.slane %v187, 0
    %191 = vmatpush.msra.mxu0 %v186
    %192 = vmatpush.msra.mxu0 %v185
    %193 = vmatpush.msra.mxu0 %v184
    %194 = vmatpush.msra.mxu0 %v183
    %195 = vmatpush.msra.mxu0 %v182
    %196 = vmatpush.msra.mxu0 %v181
    %197 = vmatpush.msra.mxu0 %v180
    %198 = vmatpush.msra.mxu0 %v179
    %199 = vmatpush.msra.mxu0 %v178
    %200 = vmatpush.msra.mxu0 %v177
    %201 = vmatpush.msra.mxu0 %v176
    %202 = vmatpush.msra.mxu0 %v175
    %203 = vmatpush.msra.mxu0 %v174
    %204 = vmatpush.msra.mxu0 %v173
    %205 = vmatpush.msra.mxu0 %v172
    %206 = vmatpush.msra.mxu0 %v171
    %207 = vmatmul.f32.gmra.mxu0 %v170
    %v208 = vpop.f32.mrf.mxu0
    %v209 = vadd.f32 %v189, %v208
    %210 = vdwg.mxu0
    %v211 = vlaneseq
    %v212 = vand.u32 %v211, 127
    %vm213 = vcmp.ge.s32.totalorder %v212, 1
    %v214 = vmax.f32 %v209, 0.0
    %v215 = vsel %vm213, %v214, %v209
    %v216 = vlaneseq
    %v217 = vshrl.u32 %v216, 7
    %v218 = vadd.s32 %v217, 8
    %v219 = vadd.s32 %v217, 16
    %v220 = vadd.s32 %v217, 24
    %v221 = vadd.s32 %v217, 32
    %v222 = vadd.s32 %v217, 40
    %v223 = vadd.s32 %v217, 48
    %v224 = vadd.s32 %v217, 56
    %v225 = vadd.s32 %v217, 64
    %v226 = vadd.s32 %v217, 72
    %v227 = vadd.s32 %v217, 80
    %v228 = vadd.s32 %v217, 88
    %v229 = vadd.s32 %v217, 96
    %v230 = vadd.s32 %v217, 104
    %v231 = vadd.s32 %v217, 112
    %v232 = vadd.s32 %v217, 120
    %vm233 = vcmp.le.s32.totalorder %v217, %v212
    %vm234 = vcmp.le.s32.totalorder %v218, %v212
    %vm235 = vcmp.le.s32.totalorder %v219, %v212
    %vm236 = vcmp.le.s32.totalorder %v220, %v212
    %vm237 = vcmp.le.s32.totalorder %v221, %v212
    %vm238 = vcmp.le.s32.totalorder %v222, %v212
    %vm239 = vcmp.le.s32.totalorder %v223, %v212
    %vm240 = vcmp.le.s32.totalorder %v224, %v212
    %vm241 = vcmp.le.s32.totalorder %v225, %v212
    %vm242 = vcmp.le.s32.totalorder %v226, %v212
    %vm243 = vcmp.le.s32.totalorder %v227, %v212
    %vm244 = vcmp.le.s32.totalorder %v228, %v212
    %vm245 = vcmp.le.s32.totalorder %v229, %v212
    %vm246 = vcmp.le.s32.totalorder %v230, %v212
    %vm247 = vcmp.le.s32.totalorder %v231, %v212
    %vm248 = vcmp.le.s32.totalorder %v232, %v212
    %v249 = vsel %vm233, 1.0, 0.0
    %v250 = vsel %vm234, 1.0, 0.0
    %v251 = vsel %vm235, 1.0, 0.0
    %v252 = vsel %vm236, 1.0, 0.0
    %v253 = vsel %vm237, 1.0, 0.0
    %v254 = vsel %vm238, 1.0, 0.0
    %v255 = vsel %vm239, 1.0, 0.0
    %v256 = vsel %vm240, 1.0, 0.0
    %v257 = vsel %vm241, 1.0, 0.0
    %v258 = vsel %vm242, 1.0, 0.0
    %v259 = vsel %vm243, 1.0, 0.0
    %v260 = vsel %vm244, 1.0, 0.0
    %v261 = vsel %vm245, 1.0, 0.0
    %v262 = vsel %vm246, 1.0, 0.0
    %v263 = vsel %vm247, 1.0, 0.0
    %v264 = vsel %vm248, 1.0, 0.0
    %265 = vmatpush.msra.mxu0 %v264
    %266 = vmatpush.msra.mxu0 %v263
    %267 = vmatpush.msra.mxu0 %v262
    %268 = vmatpush.msra.mxu0 %v261
    %269 = vmatpush.msra.mxu0 %v260
    %270 = vmatpush.msra.mxu0 %v259
    %271 = vmatpush.msra.mxu0 %v258
    %272 = vmatpush.msra.mxu0 %v257
    %273 = vmatpush.msra.mxu0 %v256
    %274 = vmatpush.msra.mxu0 %v255
    %275 = vmatpush.msra.mxu0 %v254
    %276 = vmatpush.msra.mxu0 %v253
    %277 = vmatpush.msra.mxu0 %v252
    %278 = vmatpush.msra.mxu0 %v251
    %279 = vmatpush.msra.mxu0 %v250
    %280 = vmatpush.msra.mxu0 %v249
    %281 = vmatmul.f32.gmra.mxu0 %v215
    %v282 = vpop.f32.mrf.mxu0
    %v283 = vadd.f32 0.0, %v282
    %284 = vdwg.mxu0
    %285 = vst [vmem:[#allocation10] sm:$0xff] %v283
    // Predicated region
    $region46: #{tpu_custom_call.1} parent=1 // pred_check
      _
    $region47: #{tpu_custom_call.1} parent=1 // pred_check_branch
      %287 = sbr.rel (0) target = $region49
    $region48: #{tpu_custom_call.1} parent=1 // pred_region
      %289 = vsyncadd [#allocation4], 0
      %s291 = sshll.u32 [#allocation10], 4
      %s292 = int_to_ptr.vmem [resolvable:$true] %s291
      %s293 = sshll.u32 %s7, 4
      %s294 = int_to_ptr.hbm [resolvable:$true] %s293
      %296 = dma.vmem_to_hbm [thread:$0]  %s292, 128, %s294, [#allocation4]
    $region49: #{tpu_custom_call.1} parent=1 // pred_fallthru
      _
    // Predicated region
    $region50: #{tpu_custom_call.1} parent=1 // pred_check
      _
    $region51: #{tpu_custom_call.1} parent=1 // pred_check_branch
      %298 = sbr.rel (0) target = $region53
    $region52: #{tpu_custom_call.1} parent=1 // pred_region
      %300 = dma.done [#allocation4], 128
    $region53: #{tpu_custom_call.1} parent=1 // pred_fallthru
      _
    %301 = vsyncpa [#allocation3], 1
    %302 = vsyncpa [#allocation6], 1
    %303 = vsyncpa [#allocation9], 1
    %304 = vsyncpa [#allocation4], 1

</llo_original>
